<compile_context>
chip_gen: v6e
topology: v6e:2x2x1
jax: 0.10.0
libtpu: 0.0.40
codegen_flags: <defaults>
</compile_context>

<pallas_src>
import jax
import jax.numpy as jnp
from jax import lax
from jax.experimental import pallas as pl
from jax.experimental.pallas import tpu as pltpu


def _default_matmul_dtype():
    """bf16 MXU operands on v6e/v7x; f32 on v5e (no native bf16 VPU there)."""
    try:
        kind = jax.devices()[0].device_kind.lower()
    except Exception:
        return jnp.bfloat16
    return jnp.float32 if "v5" in kind else jnp.bfloat16


def vanilla_rnn_kernel(pre_in_ref, mask_ref, w_hh_ref, w_fc_ref, b_fc_ref,
                       out_ref, h_ref):
    """One T-tile of the RNN recurrence; fc reduction on the last tile.

    pre_in_ref : (tT, B, H) bf16/f32  precomputed x_t @ W_ih + (b_ih+b_hh), time-major
    mask_ref   : (tT, B, 1) f32       1.0 where t < length else 0.0, time-major
    w_hh_ref   : (H, H)     bf16/f32  transposed PyTorch weight_hh_l0
    w_fc_ref   : (1, H)     f32       PyTorch fc.weight (output_dim == 1)
    b_fc_ref   : (1, 1)     f32       fc.bias (SMEM scalar)
    out_ref    : (B, 1)     f32       resident output block (same across grid)
    h_ref      : (B, H)     f32       VMEM scratch carrying h across grid steps
    """
    t_tile = pre_in_ref.shape[0]
    t0 = pl.program_id(0)

    @pl.when(t0 == 0)
    def _():
        h_ref[...] = jnp.zeros_like(h_ref)

    # Loop-invariant hoist: one VMEM load of W_hh per tile.
    w_hh = w_hh_ref[...]

    def step(t, h):
        # pack_padded_sequence semantics: h stops updating once t >= length,
        # so the final hidden state equals the state at the last valid step.
        pre = pre_in_ref[t].astype(jnp.float32) + jnp.dot(
            h.astype(w_hh.dtype), w_hh, preferred_element_type=jnp.float32)
        h_new = jnp.tanh(pre)
        m = mask_ref[t]                      # (B, 1) f32, precomputed in wrapper
        return h + m * (h_new - h)           # FMA-form select on the serial chain

    # Bounded unroll within the tile so the LLO scheduler can pipeline
    # MXU pushes / tanh / select across steps without code-size blowup.
    h_ref[...] = lax.fori_loop(0, t_tile, step, h_ref[...], unroll=True)

    @pl.when(t0 == pl.num_programs(0) - 1)
    def _():
        # output_dim == 1: VPU multiply + row reduction instead of a
        # 1/128-lane-utilized MXU pass.
        h = h_ref[...]
        out_ref[...] = (jnp.sum(h * w_fc_ref[...], axis=-1, keepdims=True)
                        + b_fc_ref[0, 0])


def prepare_vanilla_rnn_params(embedding, w_ih, w_hh, b_ih, b_hh, w_fc, b_fc,
                               *, activation_dtype=jnp.bfloat16,
                               matmul_dtype=None):
    """One-time fold of the frozen embedding / W_ih / RNN bias (per-call cost: zero).

    Expects JAX-layout matrices: w_ih (E,H), w_hh (H,H), w_fc (H,1)
    (i.e. transposed PyTorch weight_ih_l0 / weight_hh_l0 / fc.weight).
    """
    if matmul_dtype is None:
        matmul_dtype = _default_matmul_dtype()
    emb_proj = (embedding.astype(jnp.float32) @ w_ih.astype(jnp.float32)
                + (b_ih + b_hh).astype(jnp.float32))            # (VOCAB, H)
    return dict(
        emb_proj=emb_proj.astype(activation_dtype),             # (VOCAB, H)
        w_hh=w_hh.astype(matmul_dtype),                         # (H, H)
        w_fc=jnp.reshape(w_fc, (1, -1)).astype(jnp.float32),    # (1, H)
        b_fc=jnp.reshape(b_fc, (1, 1)).astype(jnp.float32),     # (1, 1)
    )


def vanilla_rnn_forward(input_ids, attention_mask, prepared, *, t_tile=8):
    """JAX glue: time-major gather + mask build + one T-tiled pallas_call."""
    B, T = input_ids.shape
    emb_proj = prepared["emb_proj"]
    H = emb_proj.shape[-1]

    # Time-major gather: transpose the tiny int32 ids, not the (T,B,H) floats.
    pre_in = emb_proj[input_ids.T]                               # (T, B, H)

    # lengths = clamp(attention_mask.sum(dim=1), min=1); mask built once,
    # time-major (T, B, 1).  Exactly matches pack_padded_sequence, which only
    # consumes lengths.
    lengths = jnp.maximum(attention_mask.astype(jnp.int32).sum(axis=1), 1)   # (B,)
    mask = (jnp.arange(T, dtype=jnp.int32)[:, None] < lengths[None, :])
    mask = mask.astype(jnp.float32)[:, :, None]                  # (T, B, 1)

    # Pad batch to a sublane multiple; padded rows have mask 0 -> h stays 0.
    b_pad = -(-B // 8) * 8
    if b_pad != B:
        pre_in = jnp.pad(pre_in, ((0, 0), (0, b_pad - B), (0, 0)))
        mask = jnp.pad(mask, ((0, 0), (0, b_pad - B), (0, 0)))

    # Pad T to a tile multiple; padded steps have mask 0 (no-op on h).
    n_t = -(-T // t_tile)
    t_pad = n_t * t_tile
    if t_pad != T:
        pre_in = jnp.pad(pre_in, ((0, t_pad - T), (0, 0), (0, 0)))
        mask = jnp.pad(mask, ((0, t_pad - T), (0, 0), (0, 0)))

    out = pl.pallas_call(
        vanilla_rnn_kernel,
        out_shape=jax.ShapeDtypeStruct((b_pad, 1), jnp.float32),
        grid_spec=pltpu.PrefetchScalarGridSpec(
            num_scalar_prefetch=0,
            grid=(n_t,),
            in_specs=[
                # Double-buffered T-tiles: next chunk's DMA hides behind the
                # latency-bound recurrence of the current chunk.
                pl.BlockSpec((t_tile, b_pad, H), lambda t: (t, 0, 0)),
                pl.BlockSpec((t_tile, b_pad, 1), lambda t: (t, 0, 0)),
                # Weights: same block index every step -> fetched once.
                pl.BlockSpec((H, H), lambda t: (0, 0)),
                pl.BlockSpec((1, H), lambda t: (0, 0)),
                # Scalar bias lives in SMEM (no wasted (8,128) VMEM tile).
                pl.BlockSpec(memory_space=pltpu.MemorySpace.SMEM),
            ],
            out_specs=pl.BlockSpec((b_pad, 1), lambda t: (0, 0)),
            scratch_shapes=[pltpu.VMEM((b_pad, H), jnp.float32)],   # carried h
        ),
        compiler_params=pltpu.CompilerParams(
            dimension_semantics=("arbitrary",)),                    # serial in T
    )(pre_in, mask, prepared["w_hh"], prepared["w_fc"], prepared["b_fc"])

    return out[:B]


if __name__ == "__main__":
    # Small, module-consistent shapes (HIDDEN_DIM = 128, output_dim = 1).
    VOCAB, EMB, HID, OUT = 64, 32, 128, 1
    B, T = 8, 16

    key = jax.random.PRNGKey(0)
    ks = jax.random.split(key, 8)

    # Deterministic synthetic parameters in JAX layout (transposed PyTorch).
    embedding = jax.random.normal(ks[0], (VOCAB, EMB), jnp.float32) * 0.1  # frozen
    w_ih = jax.random.normal(ks[1], (EMB, HID), jnp.float32) * 0.1
    w_hh = jax.random.normal(ks[2], (HID, HID), jnp.float32) * 0.1
    b_ih = jax.random.normal(ks[3], (HID,), jnp.float32) * 0.1
    b_hh = jax.random.normal(ks[4], (HID,), jnp.float32) * 0.1
    w_fc = jax.random.normal(ks[5], (HID, OUT), jnp.float32) * 0.1
    b_fc = jax.random.normal(ks[6], (OUT,), jnp.float32) * 0.1

    activation_dtype = jnp.bfloat16          # bf16 pre_in on all generations
    matmul_dtype = _default_matmul_dtype()   # bf16 on v6e/v7x, f32 on v5e

    # Frozen-parameter fold: done ONCE, not per forward call.
    prepared = prepare_vanilla_rnn_params(
        embedding, w_ih, w_hh, b_ih, b_hh, w_fc, b_fc,
        activation_dtype=activation_dtype, matmul_dtype=matmul_dtype)

    # Deterministic inputs: padded token ids + contiguous-prefix attention mask
    # (includes a zero-length row, clamped to 1 like the PyTorch module).
    input_ids = jax.random.randint(ks[7], (B, T), 0, VOCAB)
    true_lengths = jnp.array([16, 11, 5, 1, 9, 2, 13, 0], dtype=jnp.int32)
    attention_mask = (jnp.arange(T)[None, :] < true_lengths[:, None]).astype(jnp.int32)

    out = vanilla_rnn_forward(input_ids, attention_mask, prepared, t_tile=8)
    out = jax.block_until_ready(out)
    assert out.shape == (B, OUT)

    # Pure-JAX f32 reference of the exact PyTorch semantics.
    def ref_forward(ids, mask_):
        e = embedding[ids]                                  # (B, T, E)
        L = jnp.maximum(mask_.sum(axis=1), 1)               # clamp(lengths, min=1)
        h = jnp.zeros((B, HID), jnp.float32)
        for t in range(T):
            h_new = jnp.tanh(e[:, t] @ w_ih + h @ w_hh + b_ih + b_hh)
            h = jnp.where((t < L)[:, None], h_new, h)       # final state at t = length-1
        return h @ w_fc + b_fc

    ref = ref_forward(input_ids, attention_mask)
    exact = (activation_dtype == jnp.float32) and (matmul_dtype == jnp.float32)
    atol = 1e-5 if exact else 3e-2                          # bf16 operands need slack
    err = jnp.max(jnp.abs(out - ref))
    assert jnp.allclose(out, ref, atol=atol, rtol=atol), f"max abs err {err}"

    print("KERNEL_OK")
</pallas_src>

<mosaic_0001>
module attributes {stable_mosaic.version = 11 : i64} {
  func.func @vanilla_rnn_kernel(%arg0: i32, %arg1: memref<8x8x128xbf16, #tpu.memory_space<vmem>>, %arg2: memref<8x8x1xf32, #tpu.memory_space<vmem>>, %arg3: memref<128x128xbf16, #tpu.memory_space<vmem>>, %arg4: memref<1x128xf32, #tpu.memory_space<vmem>>, %arg5: memref<1x1xf32, #tpu.memory_space<smem>>, %arg6: memref<8x1xf32, #tpu.memory_space<vmem>>, %arg7: memref<8x128xf32, #tpu.memory_space<vmem>>) attributes {dimension_semantics = [#tpu.dimension_semantics<arbitrary>], iteration_bounds = array<i64: 2>, scalar_prefetch = 0 : i64, scratch_operands = 1 : i64, tpu.core_type = #tpu.core_type<tc>, window_params = [{transform_indices = @transform_0, window_bounds = array<i64: 8, 8, 128>}, {transform_indices = @transform_1, window_bounds = array<i64: 8, 8, 1>}, {pipeline_mode = #tpu.pipeline_mode<synchronous>, transform_indices = @transform_2, window_bounds = array<i64: 128, 128>}, {pipeline_mode = #tpu.pipeline_mode<synchronous>, transform_indices = @transform_3, window_bounds = array<i64: 1, 128>}, {transform_indices = @transform_4, window_bounds = array<i64: 1, 1>}, {pipeline_mode = #tpu.pipeline_mode<synchronous>, transform_indices = @transform_5, window_bounds = array<i64: 8, 1>}]} {
    %c0_i32 = arith.constant 0 : i32
    %0 = arith.cmpi eq, %arg0, %c0_i32 : i32
    %1 = arith.extui %0 : i1 to i32
    %c0_i32_0 = arith.constant 0 : i32
    %2 = arith.cmpi ne, %1, %c0_i32_0 : i32
    scf.if %2 {
      %cst_48 = arith.constant 0.000000e+00 : f32
      %129 = vector.broadcast %cst_48 : f32 to vector<8x128xf32>
      %c0_49 = arith.constant 0 : index
      %c0_50 = arith.constant 0 : index
      %130 = vector.load %arg7[%c0_49, %c0_50] : memref<8x128xf32, #tpu.memory_space<vmem>>, vector<8x128xf32>
      tpu.vector_store %arg7[%c0_49, %c0_50], %129 {strides = array<i32>} : memref<8x128xf32, #tpu.memory_space<vmem>>, vector<8x128xf32>,
    } else {
    }
    %c0 = arith.constant 0 : index
    %c0_1 = arith.constant 0 : index
    %3 = vector.load %arg3[%c0, %c0_1] : memref<128x128xbf16, #tpu.memory_space<vmem>>, vector<128x128xbf16>
    %c0_2 = arith.constant 0 : index
    %c0_3 = arith.constant 0 : index
    %4 = vector.load %arg7[%c0_2, %c0_3] : memref<8x128xf32, #tpu.memory_space<vmem>>, vector<8x128xf32>
    %c0_i32_4 = arith.constant 0 : i32
    %5 = arith.index_cast %c0_i32_4 : i32 to index
    %c0_5 = arith.constant 0 : index
    %c0_6 = arith.constant 0 : index
    %6 = vector.load %arg1[%5, %c0_5, %c0_6] : memref<8x8x128xbf16, #tpu.memory_space<vmem>>, vector<1x8x128xbf16>
    %7 = vector.shape_cast %6 : vector<1x8x128xbf16> to vector<8x128xbf16>
    %8 = arith.extf %7 : vector<8x128xbf16> to vector<8x128xf32>
    %9 = arith.truncf %4 : vector<8x128xf32> to vector<8x128xbf16>
    %cst = arith.constant dense<0.000000e+00> : vector<8x128xf32>
    %10 = tpu.matmul %9, %3, %cst {dimension_numbers = #tpu.dot_dimension_numbers<[1], [0], [0], [1], [0, 0, 1, 1], [], []>} : vector<8x128xbf16>, vector<128x128xbf16>, vector<8x128xf32> -> vector<8x128xf32>
    %11 = arith.addf %8, %10 : vector<8x128xf32>
    %12 = math.tanh %11 : vector<8x128xf32>
    %13 = arith.index_cast %c0_i32_4 : i32 to index
    %c0_7 = arith.constant 0 : index
    %c0_8 = arith.constant 0 : index
    %14 = vector.load %arg2[%13, %c0_7, %c0_8] : memref<8x8x1xf32, #tpu.memory_space<vmem>>, vector<1x8x1xf32>
    %15 = vector.shape_cast %14 : vector<1x8x1xf32> to vector<8x1xf32>
    %16 = arith.subf %12, %4 : vector<8x128xf32>
    %17 = vector.broadcast %15 : vector<8x1xf32> to vector<8x128xf32>
    %18 = arith.mulf %17, %16 : vector<8x128xf32>
    %19 = arith.addf %4, %18 : vector<8x128xf32>
    %c1_i32 = arith.constant 1 : i32
    %20 = arith.index_cast %c1_i32 : i32 to index
    %c0_9 = arith.constant 0 : index
    %c0_10 = arith.constant 0 : index
    %21 = vector.load %arg1[%20, %c0_9, %c0_10] : memref<8x8x128xbf16, #tpu.memory_space<vmem>>, vector<1x8x128xbf16>
    %22 = vector.shape_cast %21 : vector<1x8x128xbf16> to vector<8x128xbf16>
    %23 = arith.extf %22 : vector<8x128xbf16> to vector<8x128xf32>
    %24 = arith.truncf %19 : vector<8x128xf32> to vector<8x128xbf16>
    %cst_11 = arith.constant dense<0.000000e+00> : vector<8x128xf32>
    %25 = tpu.matmul %24, %3, %cst_11 {dimension_numbers = #tpu.dot_dimension_numbers<[1], [0], [0], [1], [0, 0, 1, 1], [], []>} : vector<8x128xbf16>, vector<128x128xbf16>, vector<8x128xf32> -> vector<8x128xf32>
    %26 = arith.addf %23, %25 : vector<8x128xf32>
    %27 = math.tanh %26 : vector<8x128xf32>
    %28 = arith.index_cast %c1_i32 : i32 to index
    %c0_12 = arith.constant 0 : index
    %c0_13 = arith.constant 0 : index
    %29 = vector.load %arg2[%28, %c0_12, %c0_13] : memref<8x8x1xf32, #tpu.memory_space<vmem>>, vector<1x8x1xf32>
    %30 = vector.shape_cast %29 : vector<1x8x1xf32> to vector<8x1xf32>
    %31 = arith.subf %27, %19 : vector<8x128xf32>
    %32 = vector.broadcast %30 : vector<8x1xf32> to vector<8x128xf32>
    %33 = arith.mulf %32, %31 : vector<8x128xf32>
    %34 = arith.addf %19, %33 : vector<8x128xf32>
    %c2_i32 = arith.constant 2 : i32
    %35 = arith.index_cast %c2_i32 : i32 to index
    %c0_14 = arith.constant 0 : index
    %c0_15 = arith.constant 0 : index
    %36 = vector.load %arg1[%35, %c0_14, %c0_15] : memref<8x8x128xbf16, #tpu.memory_space<vmem>>, vector<1x8x128xbf16>
    %37 = vector.shape_cast %36 : vector<1x8x128xbf16> to vector<8x128xbf16>
    %38 = arith.extf %37 : vector<8x128xbf16> to vector<8x128xf32>
    %39 = arith.truncf %34 : vector<8x128xf32> to vector<8x128xbf16>
    %cst_16 = arith.constant dense<0.000000e+00> : vector<8x128xf32>
    %40 = tpu.matmul %39, %3, %cst_16 {dimension_numbers = #tpu.dot_dimension_numbers<[1], [0], [0], [1], [0, 0, 1, 1], [], []>} : vector<8x128xbf16>, vector<128x128xbf16>, vector<8x128xf32> -> vector<8x128xf32>
    %41 = arith.addf %38, %40 : vector<8x128xf32>
    %42 = math.tanh %41 : vector<8x128xf32>
    %43 = arith.index_cast %c2_i32 : i32 to index
    %c0_17 = arith.constant 0 : index
    %c0_18 = arith.constant 0 : index
    %44 = vector.load %arg2[%43, %c0_17, %c0_18] : memref<8x8x1xf32, #tpu.memory_space<vmem>>, vector<1x8x1xf32>
    %45 = vector.shape_cast %44 : vector<1x8x1xf32> to vector<8x1xf32>
    %46 = arith.subf %42, %34 : vector<8x128xf32>
    %47 = vector.broadcast %45 : vector<8x1xf32> to vector<8x128xf32>
    %48 = arith.mulf %47, %46 : vector<8x128xf32>
    %49 = arith.addf %34, %48 : vector<8x128xf32>
    %c3_i32 = arith.constant 3 : i32
    %50 = arith.index_cast %c3_i32 : i32 to index
    %c0_19 = arith.constant 0 : index
    %c0_20 = arith.constant 0 : index
    %51 = vector.load %arg1[%50, %c0_19, %c0_20] : memref<8x8x128xbf16, #tpu.memory_space<vmem>>, vector<1x8x128xbf16>
    %52 = vector.shape_cast %51 : vector<1x8x128xbf16> to vector<8x128xbf16>
    %53 = arith.extf %52 : vector<8x128xbf16> to vector<8x128xf32>
    %54 = arith.truncf %49 : vector<8x128xf32> to vector<8x128xbf16>
    %cst_21 = arith.constant dense<0.000000e+00> : vector<8x128xf32>
    %55 = tpu.matmul %54, %3, %cst_21 {dimension_numbers = #tpu.dot_dimension_numbers<[1], [0], [0], [1], [0, 0, 1, 1], [], []>} : vector<8x128xbf16>, vector<128x128xbf16>, vector<8x128xf32> -> vector<8x128xf32>
    %56 = arith.addf %53, %55 : vector<8x128xf32>
    %57 = math.tanh %56 : vector<8x128xf32>
    %58 = arith.index_cast %c3_i32 : i32 to index
    %c0_22 = arith.constant 0 : index
    %c0_23 = arith.constant 0 : index
    %59 = vector.load %arg2[%58, %c0_22, %c0_23] : memref<8x8x1xf32, #tpu.memory_space<vmem>>, vector<1x8x1xf32>
    %60 = vector.shape_cast %59 : vector<1x8x1xf32> to vector<8x1xf32>
    %61 = arith.subf %57, %49 : vector<8x128xf32>
    %62 = vector.broadcast %60 : vector<8x1xf32> to vector<8x128xf32>
    %63 = arith.mulf %62, %61 : vector<8x128xf32>
    %64 = arith.addf %49, %63 : vector<8x128xf32>
    %c4_i32 = arith.constant 4 : i32
    %65 = arith.index_cast %c4_i32 : i32 to index
    %c0_24 = arith.constant 0 : index
    %c0_25 = arith.constant 0 : index
    %66 = vector.load %arg1[%65, %c0_24, %c0_25] : memref<8x8x128xbf16, #tpu.memory_space<vmem>>, vector<1x8x128xbf16>
    %67 = vector.shape_cast %66 : vector<1x8x128xbf16> to vector<8x128xbf16>
    %68 = arith.extf %67 : vector<8x128xbf16> to vector<8x128xf32>
    %69 = arith.truncf %64 : vector<8x128xf32> to vector<8x128xbf16>
    %cst_26 = arith.constant dense<0.000000e+00> : vector<8x128xf32>
    %70 = tpu.matmul %69, %3, %cst_26 {dimension_numbers = #tpu.dot_dimension_numbers<[1], [0], [0], [1], [0, 0, 1, 1], [], []>} : vector<8x128xbf16>, vector<128x128xbf16>, vector<8x128xf32> -> vector<8x128xf32>
    %71 = arith.addf %68, %70 : vector<8x128xf32>
    %72 = math.tanh %71 : vector<8x128xf32>
    %73 = arith.index_cast %c4_i32 : i32 to index
    %c0_27 = arith.constant 0 : index
    %c0_28 = arith.constant 0 : index
    %74 = vector.load %arg2[%73, %c0_27, %c0_28] : memref<8x8x1xf32, #tpu.memory_space<vmem>>, vector<1x8x1xf32>
    %75 = vector.shape_cast %74 : vector<1x8x1xf32> to vector<8x1xf32>
    %76 = arith.subf %72, %64 : vector<8x128xf32>
    %77 = vector.broadcast %75 : vector<8x1xf32> to vector<8x128xf32>
    %78 = arith.mulf %77, %76 : vector<8x128xf32>
    %79 = arith.addf %64, %78 : vector<8x128xf32>
    %c5_i32 = arith.constant 5 : i32
    %80 = arith.index_cast %c5_i32 : i32 to index
    %c0_29 = arith.constant 0 : index
    %c0_30 = arith.constant 0 : index
    %81 = vector.load %arg1[%80, %c0_29, %c0_30] : memref<8x8x128xbf16, #tpu.memory_space<vmem>>, vector<1x8x128xbf16>
    %82 = vector.shape_cast %81 : vector<1x8x128xbf16> to vector<8x128xbf16>
    %83 = arith.extf %82 : vector<8x128xbf16> to vector<8x128xf32>
    %84 = arith.truncf %79 : vector<8x128xf32> to vector<8x128xbf16>
    %cst_31 = arith.constant dense<0.000000e+00> : vector<8x128xf32>
    %85 = tpu.matmul %84, %3, %cst_31 {dimension_numbers = #tpu.dot_dimension_numbers<[1], [0], [0], [1], [0, 0, 1, 1], [], []>} : vector<8x128xbf16>, vector<128x128xbf16>, vector<8x128xf32> -> vector<8x128xf32>
    %86 = arith.addf %83, %85 : vector<8x128xf32>
    %87 = math.tanh %86 : vector<8x128xf32>
    %88 = arith.index_cast %c5_i32 : i32 to index
    %c0_32 = arith.constant 0 : index
    %c0_33 = arith.constant 0 : index
    %89 = vector.load %arg2[%88, %c0_32, %c0_33] : memref<8x8x1xf32, #tpu.memory_space<vmem>>, vector<1x8x1xf32>
    %90 = vector.shape_cast %89 : vector<1x8x1xf32> to vector<8x1xf32>
    %91 = arith.subf %87, %79 : vector<8x128xf32>
    %92 = vector.broadcast %90 : vector<8x1xf32> to vector<8x128xf32>
    %93 = arith.mulf %92, %91 : vector<8x128xf32>
    %94 = arith.addf %79, %93 : vector<8x128xf32>
    %c6_i32 = arith.constant 6 : i32
    %95 = arith.index_cast %c6_i32 : i32 to index
    %c0_34 = arith.constant 0 : index
    %c0_35 = arith.constant 0 : index
    %96 = vector.load %arg1[%95, %c0_34, %c0_35] : memref<8x8x128xbf16, #tpu.memory_space<vmem>>, vector<1x8x128xbf16>
    %97 = vector.shape_cast %96 : vector<1x8x128xbf16> to vector<8x128xbf16>
    %98 = arith.extf %97 : vector<8x128xbf16> to vector<8x128xf32>
    %99 = arith.truncf %94 : vector<8x128xf32> to vector<8x128xbf16>
    %cst_36 = arith.constant dense<0.000000e+00> : vector<8x128xf32>
    %100 = tpu.matmul %99, %3, %cst_36 {dimension_numbers = #tpu.dot_dimension_numbers<[1], [0], [0], [1], [0, 0, 1, 1], [], []>} : vector<8x128xbf16>, vector<128x128xbf16>, vector<8x128xf32> -> vector<8x128xf32>
    %101 = arith.addf %98, %100 : vector<8x128xf32>
    %102 = math.tanh %101 : vector<8x128xf32>
    %103 = arith.index_cast %c6_i32 : i32 to index
    %c0_37 = arith.constant 0 : index
    %c0_38 = arith.constant 0 : index
    %104 = vector.load %arg2[%103, %c0_37, %c0_38] : memref<8x8x1xf32, #tpu.memory_space<vmem>>, vector<1x8x1xf32>
    %105 = vector.shape_cast %104 : vector<1x8x1xf32> to vector<8x1xf32>
    %106 = arith.subf %102, %94 : vector<8x128xf32>
    %107 = vector.broadcast %105 : vector<8x1xf32> to vector<8x128xf32>
    %108 = arith.mulf %107, %106 : vector<8x128xf32>
    %109 = arith.addf %94, %108 : vector<8x128xf32>
    %c7_i32 = arith.constant 7 : i32
    %110 = arith.index_cast %c7_i32 : i32 to index
    %c0_39 = arith.constant 0 : index
    %c0_40 = arith.constant 0 : index
    %111 = vector.load %arg1[%110, %c0_39, %c0_40] : memref<8x8x128xbf16, #tpu.memory_space<vmem>>, vector<1x8x128xbf16>
    %112 = vector.shape_cast %111 : vector<1x8x128xbf16> to vector<8x128xbf16>
    %113 = arith.extf %112 : vector<8x128xbf16> to vector<8x128xf32>
    %114 = arith.truncf %109 : vector<8x128xf32> to vector<8x128xbf16>
    %cst_41 = arith.constant dense<0.000000e+00> : vector<8x128xf32>
    %115 = tpu.matmul %114, %3, %cst_41 {dimension_numbers = #tpu.dot_dimension_numbers<[1], [0], [0], [1], [0, 0, 1, 1], [], []>} : vector<8x128xbf16>, vector<128x128xbf16>, vector<8x128xf32> -> vector<8x128xf32>
    %116 = arith.addf %113, %115 : vector<8x128xf32>
    %117 = math.tanh %116 : vector<8x128xf32>
    %118 = arith.index_cast %c7_i32 : i32 to index
    %c0_42 = arith.constant 0 : index
    %c0_43 = arith.constant 0 : index
    %119 = vector.load %arg2[%118, %c0_42, %c0_43] : memref<8x8x1xf32, #tpu.memory_space<vmem>>, vector<1x8x1xf32>
    %120 = vector.shape_cast %119 : vector<1x8x1xf32> to vector<8x1xf32>
    %121 = arith.subf %117, %109 : vector<8x128xf32>
    %122 = vector.broadcast %120 : vector<8x1xf32> to vector<8x128xf32>
    %123 = arith.mulf %122, %121 : vector<8x128xf32>
    %124 = arith.addf %109, %123 : vector<8x128xf32>
    %c8_i32 = arith.constant 8 : i32
    %c0_44 = arith.constant 0 : index
    %c0_45 = arith.constant 0 : index
    %125 = vector.load %arg7[%c0_44, %c0_45] : memref<8x128xf32, #tpu.memory_space<vmem>>, vector<8x128xf32>
    tpu.vector_store %arg7[%c0_44, %c0_45], %124 {strides = array<i32>} : memref<8x128xf32, #tpu.memory_space<vmem>>, vector<8x128xf32>,
    %c1_i32_46 = arith.constant 1 : i32
    %126 = arith.cmpi eq, %arg0, %c1_i32_46 : i32
    %127 = arith.extui %126 : i1 to i32
    %c0_i32_47 = arith.constant 0 : i32
    %128 = arith.cmpi ne, %127, %c0_i32_47 : i32
    scf.if %128 {
      %c0_48 = arith.constant 0 : index
      %c0_49 = arith.constant 0 : index
      %129 = vector.load %arg7[%c0_48, %c0_49] : memref<8x128xf32, #tpu.memory_space<vmem>>, vector<8x128xf32>
      %c0_50 = arith.constant 0 : index
      %c0_51 = arith.constant 0 : index
      %130 = vector.load %arg4[%c0_50, %c0_51] : memref<1x128xf32, #tpu.memory_space<vmem>>, vector<1x128xf32>
      %131 = vector.broadcast %130 : vector<1x128xf32> to vector<8x128xf32>
      %132 = arith.mulf %129, %131 : vector<8x128xf32>
      %cst_52 = arith.constant dense<0.000000e+00> : vector<8xf32>
      %133 = vector.multi_reduction <add>, %132, %cst_52 [1] : vector<8x128xf32> to vector<8xf32>
      %134 = vector.shape_cast %133 : vector<8xf32> to vector<8x1xf32>
      %c0_53 = arith.constant 0 : index
      %c0_54 = arith.constant 0 : index
      %135 = memref.load %arg5[%c0_53, %c0_54] : memref<1x1xf32, #tpu.memory_space<smem>>
      %136 = vector.broadcast %135 : f32 to vector<8x1xf32>
      %137 = arith.addf %134, %136 : vector<8x1xf32>
      %c0_55 = arith.constant 0 : index
      %c0_56 = arith.constant 0 : index
      %138 = vector.load %arg6[%c0_55, %c0_56] : memref<8x1xf32, #tpu.memory_space<vmem>>, vector<8x1xf32>
      tpu.vector_store %arg6[%c0_55, %c0_56], %137 {strides = array<i32>} : memref<8x1xf32, #tpu.memory_space<vmem>>, vector<8x1xf32>,
    } else {
    }
    return
  }
  func.func @transform_0(%arg0: i32) -> (i32, i32, i32) {
    %c0_i32 = arith.constant 0 : i32
    %c0_i32_0 = arith.constant 0 : i32
    %c0_i32_1 = arith.constant 0 : i32
    return %arg0, %c0_i32, %c0_i32_0 : i32, i32, i32
  }
  func.func @transform_1(%arg0: i32) -> (i32, i32, i32) {
    %c0_i32 = arith.constant 0 : i32
    %c0_i32_0 = arith.constant 0 : i32
    %c0_i32_1 = arith.constant 0 : i32
    return %arg0, %c0_i32, %c0_i32_0 : i32, i32, i32
  }
  func.func @transform_2(%arg0: i32) -> (i32, i32) {
    %c0_i32 = arith.constant 0 : i32
    %c0_i32_0 = arith.constant 0 : i32
    %c0_i32_1 = arith.constant 0 : i32
    return %c0_i32, %c0_i32_0 : i32, i32
  }
  func.func @transform_3(%arg0: i32) -> (i32, i32) {
    %c0_i32 = arith.constant 0 : i32
    %c0_i32_0 = arith.constant 0 : i32
    %c0_i32_1 = arith.constant 0 : i32
    return %c0_i32, %c0_i32_0 : i32, i32
  }
  func.func @transform_4(%arg0: i32) -> (i32, i32) {
    %c0_i32 = arith.constant 0 : i32
    %c0_i32_0 = arith.constant 0 : i32
    %c0_i32_1 = arith.constant 0 : i32
    return %c0_i32, %c0_i32_0 : i32, i32
  }
  func.func @transform_5(%arg0: i32) -> (i32, i32) {
    %c0_i32 = arith.constant 0 : i32
    %c0_i32_0 = arith.constant 0 : i32
    %c0_i32_1 = arith.constant 0 : i32
    return %c0_i32, %c0_i32_0 : i32, i32
  }
}

</mosaic_0001>

<llo_original>
// kernel: tpu_custom_call.1
$region0: #{tpu_custom_call.1}
  #allocation0 [shape = 'u32[]', space=smem, size = 0x4, offset = 0x4, fixed_abs, tag = 'smem constant byte address 0x4 - core index']
  #allocation1 [shape = 'u32[144,128]{1,0:T(1,128)}', space=vmem, size = 0x12000, scoped, tag = 'internal scratch']
  #allocation2 [shape = 'f32[8,128]{1,0:T(8,128)}', space=vmem, size = 0x1000, scoped, tag = 'scratch operand']
  #allocation3 [shape = 'f32[1,1]{1,0:T(1,128)S(6)}', space=smem, size = 0x200, scoped, tag = 'scoped memory for tpu_custom_call.1']
  %s0 = inlined_call_operand.vmem [shape: bf16[16,8,128], index: 0, kind: input, shape index: {}]
  %s1 = inlined_call_operand.vmem [shape: f32[16,8,1], index: 1, kind: input, shape index: {}]
  %s2 = inlined_call_operand.vmem [shape: bf16[128,128], index: 2, kind: input, shape index: {}]
  %s3 = inlined_call_operand.vmem [shape: f32[1,128], index: 3, kind: input, shape index: {}]
  %s4 = inlined_call_operand.<no memory space> [shape: f32[1,1], index: 4, kind: input, shape index: {}]
  %s5 = inlined_call_operand.vmem [shape: f32[8,1], index: 5, kind: output, shape index: {}]
  %s6 = sld [smem:[#allocation0]]
  $region61: #{tpu_custom_call.1} parent=0
    _
  %s8 = ssub.s32 1, %s6
  %s9 = scalar_select 0, %s8, %s6
  %10 = sst [smem:[#allocation3]] %s4
  loop: start=0, step=1, limit=4
  $region2: #{tpu_custom_call.1} parent=0 // loop_pre_header
    _
  $region3: #{tpu_custom_call.1} parent=0 // loop_header
    %s12 = sphi 0, %s16
    %p13 = scmp.ge.s32.totalorder %s12, 4
    %s22 = sphi 0, %s24
    %s25 = sphi 0, %s22
    %s26 = sphi 0, %s25
    %s42 = sphi 0, %s26
    %s48 = sphi 0, %s50
    %s51 = sphi 0, %s48
    %s52 = sphi 0, %s51
    %s68 = sphi 0, %s52
    %s72 = sphi 0, %s72
    %s74 = sphi 0, %s72
    %s75 = sphi 0, %s74
    %s89 = sphi 0, %s75
    %s93 = sphi 0, %s93
    %s95 = sphi 0, %s93
    %s96 = sphi 0, %s95
    %s110 = sphi 0, %s96
    %s114 = sphi 0, %s114
    %s116 = sphi 0, %s114
    %s117 = sphi 0, %s116
    %s131 = sphi 0, %s117
    %s135 = sphi 0, %s135
    %s137 = sphi 0, %s135
    %s138 = sphi 0, %s137
    %s152 = sphi 0, %s138
  $region4: #{tpu_custom_call.1} parent=0 // loop_header_branch
    %15 = sbr.rel (%p13) target = $region8
  $region5: #{tpu_custom_call.1} parent=0 // loop_body
    %s17 = ssub.s32 %s12, 1
    %s18 = ssub.s32 %s12, 2
    %s19 = sadd.s32 %s12, 1
    %s20 = ssub.s32 %s12, %s19
    %p21 = scmp.eq.s32.totalorder %s20, 0
    %s23 = sadd.s32 %s22, 1
    %s24 = scalar_select %p21, %s22, %s23
    %p27 = pneg %p21
    %p28 = scmp.eq.s32.totalorder %s12, 1
    %p29 = por %p27, %p28
    %p30 = scmp.ne.s32.totalorder %s22, %s25
    %p31 = scmp.eq.s32.totalorder %s12, 0
    %p32 = por %p30, %p31
    %p33 = scmp.ne.s32.totalorder %s22, %s25
    %p34 = scmp.eq.s32.totalorder %s17, 1
    %p35 = por %p33, %p34
    %p36 = scmp.ne.s32.totalorder %s25, %s26
    %p37 = scmp.eq.s32.totalorder %s17, 0
    %p38 = por %p36, %p37
    %p39 = scmp.ne.s32.totalorder %s25, %s26
    %p40 = scmp.eq.s32.totalorder %s18, 1
    %p41 = por %p39, %p40
    %p43 = scmp.ne.s32.totalorder %s26, %s42
    %p44 = scmp.eq.s32.totalorder %s18, 0
    %p45 = por %p43, %p44
    %s46 = ssub.s32 %s12, %s19
    %p47 = scmp.eq.s32.totalorder %s46, 0
    %s49 = sadd.s32 %s48, 1
    %s50 = scalar_select %p47, %s48, %s49
    %p53 = pneg %p47
    %p54 = scmp.eq.s32.totalorder %s12, 1
    %p55 = por %p53, %p54
    %p56 = scmp.ne.s32.totalorder %s48, %s51
    %p57 = scmp.eq.s32.totalorder %s12, 0
    %p58 = por %p56, %p57
    %p59 = scmp.ne.s32.totalorder %s48, %s51
    %p60 = scmp.eq.s32.totalorder %s17, 1
    %p61 = por %p59, %p60
    %p62 = scmp.ne.s32.totalorder %s51, %s52
    %p63 = scmp.eq.s32.totalorder %s17, 0
    %p64 = por %p62, %p63
    %p65 = scmp.ne.s32.totalorder %s51, %s52
    %p66 = scmp.eq.s32.totalorder %s18, 1
    %p67 = por %p65, %p66
    %p69 = scmp.ne.s32.totalorder %s52, %s68
    %p70 = scmp.eq.s32.totalorder %s18, 0
    %p71 = por %p69, %p70
    %s73 = sadd.s32 %s72, 1
    %p76 = scmp.eq.s32.totalorder %s12, 1
    %p77 = scmp.ne.s32.totalorder %s72, %s74
    %p78 = scmp.eq.s32.totalorder %s12, 0
    %p79 = por %p77, %p78
    %p80 = scmp.ne.s32.totalorder %s72, %s74
    %p81 = scmp.eq.s32.totalorder %s17, 1
    %p82 = por %p80, %p81
    %p83 = scmp.ne.s32.totalorder %s74, %s75
    %p84 = scmp.eq.s32.totalorder %s17, 0
    %p85 = por %p83, %p84
    %p86 = scmp.ne.s32.totalorder %s74, %s75
    %p87 = scmp.eq.s32.totalorder %s18, 1
    %p88 = por %p86, %p87
    %p90 = scmp.ne.s32.totalorder %s75, %s89
    %p91 = scmp.eq.s32.totalorder %s18, 0
    %p92 = por %p90, %p91
    %s94 = sadd.s32 %s93, 1
    %p97 = scmp.eq.s32.totalorder %s12, 1
    %p98 = scmp.ne.s32.totalorder %s93, %s95
    %p99 = scmp.eq.s32.totalorder %s12, 0
    %p100 = por %p98, %p99
    %p101 = scmp.ne.s32.totalorder %s93, %s95
    %p102 = scmp.eq.s32.totalorder %s17, 1
    %p103 = por %p101, %p102
    %p104 = scmp.ne.s32.totalorder %s95, %s96
    %p105 = scmp.eq.s32.totalorder %s17, 0
    %p106 = por %p104, %p105
    %p107 = scmp.ne.s32.totalorder %s95, %s96
    %p108 = scmp.eq.s32.totalorder %s18, 1
    %p109 = por %p107, %p108
    %p111 = scmp.ne.s32.totalorder %s96, %s110
    %p112 = scmp.eq.s32.totalorder %s18, 0
    %p113 = por %p111, %p112
    %s115 = sadd.s32 %s114, 1
    %p118 = scmp.eq.s32.totalorder %s12, 1
    %p119 = scmp.ne.s32.totalorder %s114, %s116
    %p120 = scmp.eq.s32.totalorder %s12, 0
    %p121 = por %p119, %p120
    %p122 = scmp.ne.s32.totalorder %s114, %s116
    %p123 = scmp.eq.s32.totalorder %s17, 1
    %p124 = por %p122, %p123
    %p125 = scmp.ne.s32.totalorder %s116, %s117
    %p126 = scmp.eq.s32.totalorder %s17, 0
    %p127 = por %p125, %p126
    %p128 = scmp.ne.s32.totalorder %s116, %s117
    %p129 = scmp.eq.s32.totalorder %s18, 1
    %p130 = por %p128, %p129
    %p132 = scmp.ne.s32.totalorder %s117, %s131
    %p133 = scmp.eq.s32.totalorder %s18, 0
    %p134 = por %p132, %p133
    %s136 = sadd.s32 %s135, 1
    %p139 = scmp.eq.s32.totalorder %s12, 1
    %p140 = scmp.ne.s32.totalorder %s135, %s137
    %p141 = scmp.eq.s32.totalorder %s12, 0
    %p142 = por %p140, %p141
    %p143 = scmp.ne.s32.totalorder %s135, %s137
    %p144 = scmp.eq.s32.totalorder %s17, 1
    %p145 = por %p143, %p144
    %p146 = scmp.ne.s32.totalorder %s137, %s138
    %p147 = scmp.eq.s32.totalorder %s17, 0
    %p148 = por %p146, %p147
    %p149 = scmp.ne.s32.totalorder %s137, %s138
    %p150 = scmp.eq.s32.totalorder %s18, 1
    %p151 = por %p149, %p150
    %p153 = scmp.ne.s32.totalorder %s138, %s152
    %p154 = scmp.eq.s32.totalorder %s18, 0
    %p155 = por %p153, %p154
    %p156 = scmp.le.s32.totalorder 1, %s12
    %p157 = scmp.lt.s32.totalorder %s12, 3
    %p158 = pnand %p156, %p157
    %p159 = pneg %p158
    // Predicated region
    $region9: #{tpu_custom_call.1} parent=5 // pred_check
      _
    $region10: #{tpu_custom_call.1} parent=5 // pred_check_branch
      %161 = sbr.rel (%p158) target = $region12
    $region11: #{tpu_custom_call.1} parent=5 // pred_region
      %s162 = ssub.s32 %s12, 1
      // Predicated region
      $region13: #{tpu_custom_call.1} parent=11 // pred_check
        %p163 = pneg %p85
      $region14: #{tpu_custom_call.1} parent=11 // pred_check_branch
        %165 = sbr.rel (%p163) target = $region16
      $region15: #{tpu_custom_call.1} parent=11 // pred_region
        _
      $region16: #{tpu_custom_call.1} parent=11 // pred_fallthru
        _
      // Predicated region
      $region17: #{tpu_custom_call.1} parent=11 // pred_check
        %p166 = pneg %p106
      $region18: #{tpu_custom_call.1} parent=11 // pred_check_branch
        %168 = sbr.rel (%p166) target = $region20
      $region19: #{tpu_custom_call.1} parent=11 // pred_region
        _
      $region20: #{tpu_custom_call.1} parent=11 // pred_fallthru
        _
      // Predicated region
      $region21: #{tpu_custom_call.1} parent=11 // pred_check
        %p169 = pneg %p127
      $region22: #{tpu_custom_call.1} parent=11 // pred_check_branch
        %171 = sbr.rel (%p169) target = $region24
      $region23: #{tpu_custom_call.1} parent=11 // pred_region
        _
      $region24: #{tpu_custom_call.1} parent=11 // pred_fallthru
        _
    $region12: #{tpu_custom_call.1} parent=5 // pred_fallthru
      _
    %p172 = scmp.lt.s32.totalorder %s12, 2
    // Predicated region
    $region25: #{tpu_custom_call.1} parent=5 // pred_check
      %p173 = pneg %p172
    $region26: #{tpu_custom_call.1} parent=5 // pred_check_branch
      %175 = sbr.rel (%p173) target = $region28
    $region27: #{tpu_custom_call.1} parent=5 // pred_region
      // Predicated region
      $region29: #{tpu_custom_call.1} parent=27 // pred_check
        %p176 = pneg %p32
      $region30: #{tpu_custom_call.1} parent=27 // pred_check_branch
        %178 = sbr.rel (%p176) target = $region32
      $region31: #{tpu_custom_call.1} parent=27 // pred_region
        %s179 = smul.u32 8, %s12
        %p180 = scmp.lt.s32.totalorder %s179, 15
        %s181 = scalar_select %p180, %s179, 15
        %s182 = smul.addr %s181, 4
        %s183 = scalar_lea.vmem %s0, %s182
        %s184 = smul.u32 8, %s12
      $region32: #{tpu_custom_call.1} parent=27 // pred_fallthru
        _
      // Predicated region
      $region33: #{tpu_custom_call.1} parent=27 // pred_check
        %p185 = pneg %p58
      $region34: #{tpu_custom_call.1} parent=27 // pred_check_branch
        %187 = sbr.rel (%p185) target = $region36
      $region35: #{tpu_custom_call.1} parent=27 // pred_region
        %s188 = smul.u32 8, %s12
        %p189 = scmp.lt.s32.totalorder %s188, 15
        %s190 = scalar_select %p189, %s188, 15
        %s191 = smul.addr %s190, 8
        %s192 = scalar_lea.vmem %s1, %s191
        %s193 = smul.u32 8, %s12
      $region36: #{tpu_custom_call.1} parent=27 // pred_fallthru
        _
    $region28: #{tpu_custom_call.1} parent=5 // pred_fallthru
      _
    %p194 = scmp.le.s32.totalorder 1, %s12
    %p195 = scmp.lt.s32.totalorder %s12, 3
    %p196 = pnand %p194, %p195
    %p197 = pneg %p196
    // Predicated region
    $region37: #{tpu_custom_call.1} parent=5 // pred_check
      _
    $region38: #{tpu_custom_call.1} parent=5 // pred_check_branch
      %199 = sbr.rel (%p196) target = $region40
    $region39: #{tpu_custom_call.1} parent=5 // pred_region
      %s200 = ssub.s32 %s12, 1
      %s201 = smul.u32 8, %s17
      %p202 = scmp.lt.s32.totalorder %s201, 15
      %s203 = scalar_select %p202, %s201, 15
      %s204 = smul.addr %s203, 4
      %s205 = scalar_lea.vmem %s0, %s204
      %p206 = pneg %p38
      %p207 = pneg %p35
      %s208 = smul.u32 8, %s17
      %p209 = scmp.lt.s32.totalorder %s208, 15
      %s210 = scalar_select %p209, %s208, 15
      %s211 = smul.addr %s210, 8
      %s212 = scalar_lea.vmem %s1, %s211
      %p213 = pneg %p64
      %p214 = pneg %p61
      %p215 = pneg %p85
      %p216 = pneg %p82
      %p217 = pneg %p106
      %p218 = pneg %p103
      %p219 = pneg %p127
      %p220 = pneg %p124
      %p221 = pneg %p148
      %p222 = pneg %p145
      %s223 = smul.u32 8, %s17
      %p224 = scmp.lt.s32.totalorder %s223, 15
      %s225 = scalar_select %p224, %s223, 15
      %s226 = smul.addr %s225, 4
      %s227 = scalar_lea.vmem %s0, %s226
      %s228 = smul.u32 8, %s17
      %s229 = smul.u32 8, %s17
      %p230 = scmp.lt.s32.totalorder %s229, 15
      %s231 = scalar_select %p230, %s229, 15
      %s232 = smul.addr %s231, 8
      %s233 = scalar_lea.vmem %s1, %s232
      %s234 = smul.u32 8, %s17
      %p236 = scmp.eq.s32.totalorder %s17, 0
      // Predicated region
      $region41: #{tpu_custom_call.1} parent=39 // pred_check
        %p237 = pneg %p236
      $region42: #{tpu_custom_call.1} parent=39 // pred_check_branch
        %239 = sbr.rel (%p237) target = $region44
      $region43: #{tpu_custom_call.1} parent=39 // pred_region
        %240 = vst [vmem:[#allocation2] sm:$0xff] 0.0
      $region44: #{tpu_custom_call.1} parent=39 // pred_fallthru
        _
      %v241 = vld [vmem:[%s2] sm:$0xf]
      %v242 = vld [vmem:[%s2 + $0x4] sm:$0xf]
      %v243 = vld [vmem:[%s2 + $0x8] sm:$0xf]
      %v244 = vld [vmem:[%s2 + $0xc] sm:$0xf]
      %v245 = vld [vmem:[%s2 + $0x10] sm:$0xf]
      %v246 = vld [vmem:[%s2 + $0x14] sm:$0xf]
      %v247 = vld [vmem:[%s2 + $0x18] sm:$0xf]
      %v248 = vld [vmem:[%s2 + $0x1c] sm:$0xf]
      %v249 = vld [vmem:[%s2 + $0x20] sm:$0xf]
      %v250 = vld [vmem:[%s2 + $0x24] sm:$0xf]
      %v251 = vld [vmem:[%s2 + $0x28] sm:$0xf]
      %v252 = vld [vmem:[%s2 + $0x2c] sm:$0xf]
      %v253 = vld [vmem:[%s2 + $0x30] sm:$0xf]
      %v254 = vld [vmem:[%s2 + $0x34] sm:$0xf]
      %v255 = vld [vmem:[%s2 + $0x38] sm:$0xf]
      %v256 = vld [vmem:[%s2 + $0x3c] sm:$0xf]
      %v257 = vld [vmem:[#allocation2] sm:$0xff]
      %v258 = vld [vmem:[%s227] sm:$0xf]
      %v259 = vunpack.c.l.bf16 %v258
      %v260 = vpack.c.bf16 %v257, %v257
      %v277 = vunpack.c.l.b16 %v241
      %v278 = vunpack.c.l.b16 %v242
      %v279 = vunpack.c.l.b16 %v243
      %v280 = vunpack.c.l.b16 %v244
      %v281 = vunpack.c.l.b16 %v245
      %v282 = vunpack.c.l.b16 %v246
      %v283 = vunpack.c.l.b16 %v247
      %v284 = vunpack.c.l.b16 %v248
      %v285 = vunpack.c.l.b16 %v249
      %v286 = vunpack.c.l.b16 %v250
      %v287 = vunpack.c.l.b16 %v251
      %v288 = vunpack.c.l.b16 %v252
      %v289 = vunpack.c.l.b16 %v253
      %v290 = vunpack.c.l.b16 %v254
      %v291 = vunpack.c.l.b16 %v255
      %v292 = vunpack.c.l.b16 %v256
      %v293 = vpack.c.b16 %v278, %v277
      %v294 = vpack.c.b16 %v280, %v279
      %v295 = vpack.c.b16 %v282, %v281
      %v296 = vpack.c.b16 %v284, %v283
      %v297 = vpack.c.b16 %v286, %v285
      %v298 = vpack.c.b16 %v288, %v287
      %v299 = vpack.c.b16 %v290, %v289
      %v300 = vpack.c.b16 %v292, %v291
      %309 = vmatprep.subr.bf16.mxu0 0
      %310 = vmatpush1.bf16.msra.mxu0 %v300
      %311 = vmatprep.subr.bf16.mxu0 0
      %312 = vmatpush1.bf16.msra.mxu0 %v299
      %313 = vmatprep.subr.bf16.mxu0 0
      %314 = vmatpush1.bf16.msra.mxu0 %v298
      %315 = vmatprep.subr.bf16.mxu0 0
      %316 = vmatpush1.bf16.msra.mxu0 %v297
      %317 = vmatprep.subr.bf16.mxu0 0
      %318 = vmatpush1.bf16.msra.mxu0 %v296
      %319 = vmatprep.subr.bf16.mxu0 0
      %320 = vmatpush1.bf16.msra.mxu0 %v295
      %321 = vmatprep.subr.bf16.mxu0 0
      %322 = vmatpush1.bf16.msra.mxu0 %v294
      %323 = vmatprep.subr.bf16.mxu0 0
      %324 = vmatpush1.bf16.msra.mxu0 %v293
      %325 = vmatprep.subr.bf16.mxu0 0
      %326 = vmatpush2.bf16.msra.mxu0 0
      %327 = vmatprep.subr.bf16.mxu0 0
      %328 = vmatpush2.bf16.msra.mxu0 0
      %329 = vmatprep.subr.bf16.mxu0 0
      %330 = vmatpush2.bf16.msra.mxu0 0
      %331 = vmatprep.subr.bf16.mxu0 0
      %332 = vmatpush2.bf16.msra.mxu0 0
      %333 = vmatprep.subr.bf16.mxu0 0
      %334 = vmatpush2.bf16.msra.mxu0 0
      %335 = vmatprep.subr.bf16.mxu0 0
      %336 = vmatpush2.bf16.msra.mxu0 0
      %337 = vmatprep.subr.bf16.mxu0 0
      %338 = vmatpush2.bf16.msra.mxu0 0
      %339 = vmatprep.subr.bf16.mxu0 0
      %340 = vmatpush2.bf16.msra.mxu0 0
      %341 = vmatprep.mubr.bf16.mxu0 0
      %342 = vmatmul.mubr.bf16.gmra.mxu0 %v260
      %v343 = vpop.f32.mrf.mxu0
      %v344 = vadd.f32 0.0, %v343
      %v345 = vpop.f32.mrf.mxu0
      %v346 = vpop.f32.mrf.mxu0
      %v347 = vpop.f32.mrf.mxu0
      %348 = vdwg.mxu0
      %v349 = vadd.f32 %v259, %v344
      %v350 = vtanh.pop %v349
      %v351 = vld [vmem:[%s233] sm:$0xff]
      %v352 = vsub.f32 %v350, %v257
      %354 = vset.pattern.permute.xlu0 0
      %355 = vperm.xlu0 %354, %v351
      %v356 = vpop.permute.xlu0 %355
      %v358 = vmul.f32 %v356, %v352
      %v359 = vadd.f32 %v257, %v358
      %s360 = scalar_lea.vmem %s227, 4
      %v361 = vld [vmem:[%s360] sm:$0xf]
      %v362 = vunpack.c.l.bf16 %v361
      %v363 = vpack.c.bf16 %v359, %v359
      %364 = vmatprep.subr.bf16.mxu0 0
      %365 = vmatpush1.bf16.msra.mxu0 %v300
      %366 = vmatprep.subr.bf16.mxu0 0
      %367 = vmatpush1.bf16.msra.mxu0 %v299
      %368 = vmatprep.subr.bf16.mxu0 0
      %369 = vmatpush1.bf16.msra.mxu0 %v298
      %370 = vmatprep.subr.bf16.mxu0 0
      %371 = vmatpush1.bf16.msra.mxu0 %v297
      %372 = vmatprep.subr.bf16.mxu0 0
      %373 = vmatpush1.bf16.msra.mxu0 %v296
      %374 = vmatprep.subr.bf16.mxu0 0
      %375 = vmatpush1.bf16.msra.mxu0 %v295
      %376 = vmatprep.subr.bf16.mxu0 0
      %377 = vmatpush1.bf16.msra.mxu0 %v294
      %378 = vmatprep.subr.bf16.mxu0 0
      %379 = vmatpush1.bf16.msra.mxu0 %v293
      %380 = vmatprep.subr.bf16.mxu0 0
      %381 = vmatpush2.bf16.msra.mxu0 0
      %382 = vmatprep.subr.bf16.mxu0 0
      %383 = vmatpush2.bf16.msra.mxu0 0
      %384 = vmatprep.subr.bf16.mxu0 0
      %385 = vmatpush2.bf16.msra.mxu0 0
      %386 = vmatprep.subr.bf16.mxu0 0
      %387 = vmatpush2.bf16.msra.mxu0 0
      %388 = vmatprep.subr.bf16.mxu0 0
      %389 = vmatpush2.bf16.msra.mxu0 0
      %390 = vmatprep.subr.bf16.mxu0 0
      %391 = vmatpush2.bf16.msra.mxu0 0
      %392 = vmatprep.subr.bf16.mxu0 0
      %393 = vmatpush2.bf16.msra.mxu0 0
      %394 = vmatprep.subr.bf16.mxu0 0
      %395 = vmatpush2.bf16.msra.mxu0 0
      %396 = vmatprep.mubr.bf16.mxu0 0
      %397 = vmatmul.mubr.bf16.gmra.mxu0 %v363
      %v398 = vpop.f32.mrf.mxu0
      %v399 = vadd.f32 0.0, %v398
      %v400 = vpop.f32.mrf.mxu0
      %v401 = vpop.f32.mrf.mxu0
      %v402 = vpop.f32.mrf.mxu0
      %403 = vdwg.mxu0
      %v404 = vadd.f32 %v362, %v399
      %v405 = vtanh.pop %v404
      %s406 = scalar_lea.vmem %s233, 8
      %v407 = vld [vmem:[%s406] sm:$0xff]
      %v408 = vsub.f32 %v405, %v359
      %410 = vset.pattern.permute.xlu0 0
      %411 = vperm.xlu0 %410, %v407
      %v412 = vpop.permute.xlu0 %411
      %v414 = vmul.f32 %v412, %v408
      %v415 = vadd.f32 %v359, %v414
      %s416 = scalar_lea.vmem %s227, 8
      %v417 = vld [vmem:[%s416] sm:$0xf]
      %v418 = vunpack.c.l.bf16 %v417
      %v419 = vpack.c.bf16 %v415, %v415
      %420 = vmatprep.subr.bf16.mxu0 0
      %421 = vmatpush1.bf16.msra.mxu0 %v300
      %422 = vmatprep.subr.bf16.mxu0 0
      %423 = vmatpush1.bf16.msra.mxu0 %v299
      %424 = vmatprep.subr.bf16.mxu0 0
      %425 = vmatpush1.bf16.msra.mxu0 %v298
      %426 = vmatprep.subr.bf16.mxu0 0
      %427 = vmatpush1.bf16.msra.mxu0 %v297
      %428 = vmatprep.subr.bf16.mxu0 0
      %429 = vmatpush1.bf16.msra.mxu0 %v296
      %430 = vmatprep.subr.bf16.mxu0 0
      %431 = vmatpush1.bf16.msra.mxu0 %v295
      %432 = vmatprep.subr.bf16.mxu0 0
      %433 = vmatpush1.bf16.msra.mxu0 %v294
      %434 = vmatprep.subr.bf16.mxu0 0
      %435 = vmatpush1.bf16.msra.mxu0 %v293
      %436 = vmatprep.subr.bf16.mxu0 0
      %437 = vmatpush2.bf16.msra.mxu0 0
      %438 = vmatprep.subr.bf16.mxu0 0
      %439 = vmatpush2.bf16.msra.mxu0 0
      %440 = vmatprep.subr.bf16.mxu0 0
      %441 = vmatpush2.bf16.msra.mxu0 0
      %442 = vmatprep.subr.bf16.mxu0 0
      %443 = vmatpush2.bf16.msra.mxu0 0
      %444 = vmatprep.subr.bf16.mxu0 0
      %445 = vmatpush2.bf16.msra.mxu0 0
      %446 = vmatprep.subr.bf16.mxu0 0
      %447 = vmatpush2.bf16.msra.mxu0 0
      %448 = vmatprep.subr.bf16.mxu0 0
      %449 = vmatpush2.bf16.msra.mxu0 0
      %450 = vmatprep.subr.bf16.mxu0 0
      %451 = vmatpush2.bf16.msra.mxu0 0
      %452 = vmatprep.mubr.bf16.mxu0 0
      %453 = vmatmul.mubr.bf16.gmra.mxu0 %v419
      %v454 = vpop.f32.mrf.mxu0
      %v455 = vadd.f32 0.0, %v454
      %v456 = vpop.f32.mrf.mxu0
      %v457 = vpop.f32.mrf.mxu0
      %v458 = vpop.f32.mrf.mxu0
      %459 = vdwg.mxu0
      %v460 = vadd.f32 %v418, %v455
      %v461 = vtanh.pop %v460
      %s462 = scalar_lea.vmem %s233, 16
      %v463 = vld [vmem:[%s462] sm:$0xff]
      %v464 = vsub.f32 %v461, %v415
      %466 = vset.pattern.permute.xlu0 0
      %467 = vperm.xlu0 %466, %v463
      %v468 = vpop.permute.xlu0 %467
      %v470 = vmul.f32 %v468, %v464
      %v471 = vadd.f32 %v415, %v470
      %s472 = scalar_lea.vmem %s227, 12
      %v473 = vld [vmem:[%s472] sm:$0xf]
      %v474 = vunpack.c.l.bf16 %v473
      %v475 = vpack.c.bf16 %v471, %v471
      %476 = vmatprep.subr.bf16.mxu0 0
      %477 = vmatpush1.bf16.msra.mxu0 %v300
      %478 = vmatprep.subr.bf16.mxu0 0
      %479 = vmatpush1.bf16.msra.mxu0 %v299
      %480 = vmatprep.subr.bf16.mxu0 0
      %481 = vmatpush1.bf16.msra.mxu0 %v298
      %482 = vmatprep.subr.bf16.mxu0 0
      %483 = vmatpush1.bf16.msra.mxu0 %v297
      %484 = vmatprep.subr.bf16.mxu0 0
      %485 = vmatpush1.bf16.msra.mxu0 %v296
      %486 = vmatprep.subr.bf16.mxu0 0
      %487 = vmatpush1.bf16.msra.mxu0 %v295
      %488 = vmatprep.subr.bf16.mxu0 0
      %489 = vmatpush1.bf16.msra.mxu0 %v294
      %490 = vmatprep.subr.bf16.mxu0 0
      %491 = vmatpush1.bf16.msra.mxu0 %v293
      %492 = vmatprep.subr.bf16.mxu0 0
      %493 = vmatpush2.bf16.msra.mxu0 0
      %494 = vmatprep.subr.bf16.mxu0 0
      %495 = vmatpush2.bf16.msra.mxu0 0
      %496 = vmatprep.subr.bf16.mxu0 0
      %497 = vmatpush2.bf16.msra.mxu0 0
      %498 = vmatprep.subr.bf16.mxu0 0
      %499 = vmatpush2.bf16.msra.mxu0 0
      %500 = vmatprep.subr.bf16.mxu0 0
      %501 = vmatpush2.bf16.msra.mxu0 0
      %502 = vmatprep.subr.bf16.mxu0 0
      %503 = vmatpush2.bf16.msra.mxu0 0
      %504 = vmatprep.subr.bf16.mxu0 0
      %505 = vmatpush2.bf16.msra.mxu0 0
      %506 = vmatprep.subr.bf16.mxu0 0
      %507 = vmatpush2.bf16.msra.mxu0 0
      %508 = vmatprep.mubr.bf16.mxu0 0
      %509 = vmatmul.mubr.bf16.gmra.mxu0 %v475
      %v510 = vpop.f32.mrf.mxu0
      %v511 = vadd.f32 0.0, %v510
      %v512 = vpop.f32.mrf.mxu0
      %v513 = vpop.f32.mrf.mxu0
      %v514 = vpop.f32.mrf.mxu0
      %515 = vdwg.mxu0
      %v516 = vadd.f32 %v474, %v511
      %v517 = vtanh.pop %v516
      %s518 = scalar_lea.vmem %s233, 24
      %v519 = vld [vmem:[%s518] sm:$0xff]
      %v520 = vsub.f32 %v517, %v471
      %522 = vset.pattern.permute.xlu0 0
      %523 = vperm.xlu0 %522, %v519
      %v524 = vpop.permute.xlu0 %523
      %v526 = vmul.f32 %v524, %v520
      %v527 = vadd.f32 %v471, %v526
      %s528 = scalar_lea.vmem %s227, 16
      %v529 = vld [vmem:[%s528] sm:$0xf]
      %v530 = vunpack.c.l.bf16 %v529
      %v531 = vpack.c.bf16 %v527, %v527
      %532 = vmatprep.subr.bf16.mxu0 0
      %533 = vmatpush1.bf16.msra.mxu0 %v300
      %534 = vmatprep.subr.bf16.mxu0 0
      %535 = vmatpush1.bf16.msra.mxu0 %v299
      %536 = vmatprep.subr.bf16.mxu0 0
      %537 = vmatpush1.bf16.msra.mxu0 %v298
      %538 = vmatprep.subr.bf16.mxu0 0
      %539 = vmatpush1.bf16.msra.mxu0 %v297
      %540 = vmatprep.subr.bf16.mxu0 0
      %541 = vmatpush1.bf16.msra.mxu0 %v296
      %542 = vmatprep.subr.bf16.mxu0 0
      %543 = vmatpush1.bf16.msra.mxu0 %v295
      %544 = vmatprep.subr.bf16.mxu0 0
      %545 = vmatpush1.bf16.msra.mxu0 %v294
      %546 = vmatprep.subr.bf16.mxu0 0
      %547 = vmatpush1.bf16.msra.mxu0 %v293
      %548 = vmatprep.subr.bf16.mxu0 0
      %549 = vmatpush2.bf16.msra.mxu0 0
      %550 = vmatprep.subr.bf16.mxu0 0
      %551 = vmatpush2.bf16.msra.mxu0 0
      %552 = vmatprep.subr.bf16.mxu0 0
      %553 = vmatpush2.bf16.msra.mxu0 0
      %554 = vmatprep.subr.bf16.mxu0 0
      %555 = vmatpush2.bf16.msra.mxu0 0
      %556 = vmatprep.subr.bf16.mxu0 0
      %557 = vmatpush2.bf16.msra.mxu0 0
      %558 = vmatprep.subr.bf16.mxu0 0
      %559 = vmatpush2.bf16.msra.mxu0 0
      %560 = vmatprep.subr.bf16.mxu0 0
      %561 = vmatpush2.bf16.msra.mxu0 0
      %562 = vmatprep.subr.bf16.mxu0 0
      %563 = vmatpush2.bf16.msra.mxu0 0
      %564 = vmatprep.mubr.bf16.mxu0 0
      %565 = vmatmul.mubr.bf16.gmra.mxu0 %v531
      %v566 = vpop.f32.mrf.mxu0
      %v567 = vadd.f32 0.0, %v566
      %v568 = vpop.f32.mrf.mxu0
      %v569 = vpop.f32.mrf.mxu0
      %v570 = vpop.f32.mrf.mxu0
      %571 = vdwg.mxu0
      %v572 = vadd.f32 %v530, %v567
      %v573 = vtanh.pop %v572
      %s574 = scalar_lea.vmem %s233, 32
      %v575 = vld [vmem:[%s574] sm:$0xff]
      %v576 = vsub.f32 %v573, %v527
      %578 = vset.pattern.permute.xlu0 0
      %579 = vperm.xlu0 %578, %v575
      %v580 = vpop.permute.xlu0 %579
      %v582 = vmul.f32 %v580, %v576
      %v583 = vadd.f32 %v527, %v582
      %s584 = scalar_lea.vmem %s227, 20
      %v585 = vld [vmem:[%s584] sm:$0xf]
      %v586 = vunpack.c.l.bf16 %v585
      %v587 = vpack.c.bf16 %v583, %v583
      %588 = vmatprep.subr.bf16.mxu0 0
      %589 = vmatpush1.bf16.msra.mxu0 %v300
      %590 = vmatprep.subr.bf16.mxu0 0
      %591 = vmatpush1.bf16.msra.mxu0 %v299
      %592 = vmatprep.subr.bf16.mxu0 0
      %593 = vmatpush1.bf16.msra.mxu0 %v298
      %594 = vmatprep.subr.bf16.mxu0 0
      %595 = vmatpush1.bf16.msra.mxu0 %v297
      %596 = vmatprep.subr.bf16.mxu0 0
      %597 = vmatpush1.bf16.msra.mxu0 %v296
      %598 = vmatprep.subr.bf16.mxu0 0
      %599 = vmatpush1.bf16.msra.mxu0 %v295
      %600 = vmatprep.subr.bf16.mxu0 0
      %601 = vmatpush1.bf16.msra.mxu0 %v294
      %602 = vmatprep.subr.bf16.mxu0 0
      %603 = vmatpush1.bf16.msra.mxu0 %v293
      %604 = vmatprep.subr.bf16.mxu0 0
      %605 = vmatpush2.bf16.msra.mxu0 0
      %606 = vmatprep.subr.bf16.mxu0 0
      %607 = vmatpush2.bf16.msra.mxu0 0
      %608 = vmatprep.subr.bf16.mxu0 0
      %609 = vmatpush2.bf16.msra.mxu0 0
      %610 = vmatprep.subr.bf16.mxu0 0
      %611 = vmatpush2.bf16.msra.mxu0 0
      %612 = vmatprep.subr.bf16.mxu0 0
      %613 = vmatpush2.bf16.msra.mxu0 0
      %614 = vmatprep.subr.bf16.mxu0 0
      %615 = vmatpush2.bf16.msra.mxu0 0
      %616 = vmatprep.subr.bf16.mxu0 0
      %617 = vmatpush2.bf16.msra.mxu0 0
      %618 = vmatprep.subr.bf16.mxu0 0
      %619 = vmatpush2.bf16.msra.mxu0 0
      %620 = vmatprep.mubr.bf16.mxu0 0
      %621 = vmatmul.mubr.bf16.gmra.mxu0 %v587
      %v622 = vpop.f32.mrf.mxu0
      %v623 = vadd.f32 0.0, %v622
      %v624 = vpop.f32.mrf.mxu0
      %v625 = vpop.f32.mrf.mxu0
      %v626 = vpop.f32.mrf.mxu0
      %627 = vdwg.mxu0
      %v628 = vadd.f32 %v586, %v623
      %v629 = vtanh.pop %v628
      %s630 = scalar_lea.vmem %s233, 40
      %v631 = vld [vmem:[%s630] sm:$0xff]
      %v632 = vsub.f32 %v629, %v583
      %634 = vset.pattern.permute.xlu0 0
      %635 = vperm.xlu0 %634, %v631
      %v636 = vpop.permute.xlu0 %635
      %v638 = vmul.f32 %v636, %v632
      %v639 = vadd.f32 %v583, %v638
      %s640 = scalar_lea.vmem %s227, 24
      %v641 = vld [vmem:[%s640] sm:$0xf]
      %v642 = vunpack.c.l.bf16 %v641
      %v643 = vpack.c.bf16 %v639, %v639
      %644 = vmatprep.subr.bf16.mxu0 0
      %645 = vmatpush1.bf16.msra.mxu0 %v300
      %646 = vmatprep.subr.bf16.mxu0 0
      %647 = vmatpush1.bf16.msra.mxu0 %v299
      %648 = vmatprep.subr.bf16.mxu0 0
      %649 = vmatpush1.bf16.msra.mxu0 %v298
      %650 = vmatprep.subr.bf16.mxu0 0
      %651 = vmatpush1.bf16.msra.mxu0 %v297
      %652 = vmatprep.subr.bf16.mxu0 0
      %653 = vmatpush1.bf16.msra.mxu0 %v296
      %654 = vmatprep.subr.bf16.mxu0 0
      %655 = vmatpush1.bf16.msra.mxu0 %v295
      %656 = vmatprep.subr.bf16.mxu0 0
      %657 = vmatpush1.bf16.msra.mxu0 %v294
      %658 = vmatprep.subr.bf16.mxu0 0
      %659 = vmatpush1.bf16.msra.mxu0 %v293
      %660 = vmatprep.subr.bf16.mxu0 0
      %661 = vmatpush2.bf16.msra.mxu0 0
      %662 = vmatprep.subr.bf16.mxu0 0
      %663 = vmatpush2.bf16.msra.mxu0 0
      %664 = vmatprep.subr.bf16.mxu0 0
      %665 = vmatpush2.bf16.msra.mxu0 0
      %666 = vmatprep.subr.bf16.mxu0 0
      %667 = vmatpush2.bf16.msra.mxu0 0
      %668 = vmatprep.subr.bf16.mxu0 0
      %669 = vmatpush2.bf16.msra.mxu0 0
      %670 = vmatprep.subr.bf16.mxu0 0
      %671 = vmatpush2.bf16.msra.mxu0 0
      %672 = vmatprep.subr.bf16.mxu0 0
      %673 = vmatpush2.bf16.msra.mxu0 0
      %674 = vmatprep.subr.bf16.mxu0 0
      %675 = vmatpush2.bf16.msra.mxu0 0
      %676 = vmatprep.mubr.bf16.mxu0 0
      %677 = vmatmul.mubr.bf16.gmra.mxu0 %v643
      %v678 = vpop.f32.mrf.mxu0
      %v679 = vadd.f32 0.0, %v678
      %v680 = vpop.f32.mrf.mxu0
      %v681 = vpop.f32.mrf.mxu0
      %v682 = vpop.f32.mrf.mxu0
      %683 = vdwg.mxu0
      %v684 = vadd.f32 %v642, %v679
      %v685 = vtanh.pop %v684
      %s686 = scalar_lea.vmem %s233, 48
      %v687 = vld [vmem:[%s686] sm:$0xff]
      %v688 = vsub.f32 %v685, %v639
      %690 = vset.pattern.permute.xlu0 0
      %691 = vperm.xlu0 %690, %v687
      %v692 = vpop.permute.xlu0 %691
      %v694 = vmul.f32 %v692, %v688
      %v695 = vadd.f32 %v639, %v694
      %s696 = scalar_lea.vmem %s227, 28
      %v697 = vld [vmem:[%s696] sm:$0xf]
      %v698 = vunpack.c.l.bf16 %v697
      %v699 = vpack.c.bf16 %v695, %v695
      %700 = vmatprep.subr.bf16.mxu0 0
      %701 = vmatpush1.bf16.msra.mxu0 %v300
      %702 = vmatprep.subr.bf16.mxu0 0
      %703 = vmatpush1.bf16.msra.mxu0 %v299
      %704 = vmatprep.subr.bf16.mxu0 0
      %705 = vmatpush1.bf16.msra.mxu0 %v298
      %706 = vmatprep.subr.bf16.mxu0 0
      %707 = vmatpush1.bf16.msra.mxu0 %v297
      %708 = vmatprep.subr.bf16.mxu0 0
      %709 = vmatpush1.bf16.msra.mxu0 %v296
      %710 = vmatprep.subr.bf16.mxu0 0
      %711 = vmatpush1.bf16.msra.mxu0 %v295
      %712 = vmatprep.subr.bf16.mxu0 0
      %713 = vmatpush1.bf16.msra.mxu0 %v294
      %714 = vmatprep.subr.bf16.mxu0 0
      %715 = vmatpush1.bf16.msra.mxu0 %v293
      %716 = vmatprep.subr.bf16.mxu0 0
      %717 = vmatpush2.bf16.msra.mxu0 0
      %718 = vmatprep.subr.bf16.mxu0 0
      %719 = vmatpush2.bf16.msra.mxu0 0
      %720 = vmatprep.subr.bf16.mxu0 0
      %721 = vmatpush2.bf16.msra.mxu0 0
      %722 = vmatprep.subr.bf16.mxu0 0
      %723 = vmatpush2.bf16.msra.mxu0 0
      %724 = vmatprep.subr.bf16.mxu0 0
      %725 = vmatpush2.bf16.msra.mxu0 0
      %726 = vmatprep.subr.bf16.mxu0 0
      %727 = vmatpush2.bf16.msra.mxu0 0
      %728 = vmatprep.subr.bf16.mxu0 0
      %729 = vmatpush2.bf16.msra.mxu0 0
      %730 = vmatprep.subr.bf16.mxu0 0
      %731 = vmatpush2.bf16.msra.mxu0 0
      %732 = vmatprep.mubr.bf16.mxu0 0
      %733 = vmatmul.mubr.bf16.gmra.mxu0 %v699
      %v734 = vpop.f32.mrf.mxu0
      %v735 = vadd.f32 0.0, %v734
      %v736 = vpop.f32.mrf.mxu0
      %v737 = vpop.f32.mrf.mxu0
      %v738 = vpop.f32.mrf.mxu0
      %739 = vdwg.mxu0
      %v740 = vadd.f32 %v698, %v735
      %v741 = vtanh.pop %v740
      %s742 = scalar_lea.vmem %s233, 56
      %v743 = vld [vmem:[%s742] sm:$0xff]
      %v744 = vsub.f32 %v741, %v695
      %746 = vset.pattern.permute.xlu0 0
      %747 = vperm.xlu0 %746, %v743
      %v748 = vpop.permute.xlu0 %747
      %v750 = vmul.f32 %v748, %v744
      %v751 = vadd.f32 %v695, %v750
      %752 = vst [vmem:[#allocation2] sm:$0xff] %v751
      %p753 = scmp.eq.s32.totalorder %s17, 1
      // Predicated region
      $region45: #{tpu_custom_call.1} parent=39 // pred_check
        %p754 = pneg %p753
      $region46: #{tpu_custom_call.1} parent=39 // pred_check_branch
        %756 = sbr.rel (%p754) target = $region48
      $region47: #{tpu_custom_call.1} parent=39 // pred_region
        %v757 = vld [vmem:[#allocation2] sm:$0xff]
        %v758 = vld [vmem:[%s3] sm:$0x1]
        %v760 = vlaneseq
        %v761 = vshrl.u32 %v760, 7
        %v762 = vsub.s32 0, %v761
        %v763 = vrot.slane %v758, %v762
        %v765 = vmul.f32 %v757, %v763
        %766 = vadd.xlane.f32.xlu0 %v765
        %v767 = vpop.xlane.xlu0 %766
        %s768 = sld [smem:[#allocation3]]
        %v769 = vstv %s768
        %v770 = vadd.f32 %v767, %v769
        %vm771 = vcmask 7168
        %772 = vst.msk [vmem:[%s5] sm:$0xff] %vm771, %v770
      $region48: #{tpu_custom_call.1} parent=39 // pred_fallthru
        _
      // Predicated region
      $region49: #{tpu_custom_call.1} parent=39 // pred_check
        %p773 = pneg %p145
      $region50: #{tpu_custom_call.1} parent=39 // pred_check_branch
        %775 = sbr.rel (%p773) target = $region52
      $region51: #{tpu_custom_call.1} parent=39 // pred_region
        _
      $region52: #{tpu_custom_call.1} parent=39 // pred_fallthru
        _
      // Predicated region
      $region53: #{tpu_custom_call.1} parent=39 // pred_check
        %p776 = pneg %p145
      $region54: #{tpu_custom_call.1} parent=39 // pred_check_branch
        %778 = sbr.rel (%p776) target = $region56
      $region55: #{tpu_custom_call.1} parent=39 // pred_region
        _
      $region56: #{tpu_custom_call.1} parent=39 // pred_fallthru
        _
    $region40: #{tpu_custom_call.1} parent=5 // pred_fallthru
      _
    %p779 = scmp.le.s32.totalorder 2, %s12
    // Predicated region
    $region57: #{tpu_custom_call.1} parent=5 // pred_check
      %p780 = pneg %p779
    $region58: #{tpu_custom_call.1} parent=5 // pred_check_branch
      %782 = sbr.rel (%p780) target = $region60
    $region59: #{tpu_custom_call.1} parent=5 // pred_region
      %s783 = ssub.s32 %s12, 2
    $region60: #{tpu_custom_call.1} parent=5 // pred_fallthru
      _
  $region6: #{tpu_custom_call.1} parent=0 // loop_footer
    %s16 = sadd.s32 1, %s12
  $region7: #{tpu_custom_call.1} parent=0 // loop_footer_branch
    %11 = sbr.rel target = $region3
  $region8: #{tpu_custom_call.1} parent=0 // loop_exit
    _

</llo_original>
